<compile_context>
chip_gen: v5e
topology: v5e:2x2
jax: 0.10.0
libtpu: 0.0.40
codegen_flags: <defaults>
</compile_context>

<pallas_src>
import jax
import jax.numpy as jnp
from jax import lax
from jax.experimental import pallas as pl
from jax.experimental.pallas import tpu as pltpu


def _upsample_kernel(x_ref, p_ref, o_ref):
    # (R, k*W) @ (k*W, k*sh*W*sw) -> (R, k*sh*W*sw).  P is 0/1, so this is an
    # exact nearest-neighbour replication executed on the MXU; the result is
    # stored once, full lane width, unmasked.
    o_ref[...] = jnp.dot(
        x_ref[...], p_ref[...],
        preferred_element_type=jnp.float32,
        precision=lax.Precision.HIGHEST,
    ).astype(o_ref.dtype)


def _pick_row_group(M, per_row_out, max_lanes=2048):
    """#input rows folded into one matmul row so the output lane dim % 128 == 0."""
    for k in range(1, 33):
        if M % k == 0 and k * per_row_out <= max_lanes and (k * per_row_out) % 128 == 0:
            return k
    return 1


def _pick_block_rows(M2):
    """Largest row block dividing M2 while keeping >=2 grid steps when possible."""
    for r in (1024, 512, 256, 128, 64, 32, 16, 8):
        if M2 % r == 0 and M2 // r >= 2:
            return r
    return M2


def upsample_nearest(x, scale_factor):
    """x: (N, C, H, W); scale_factor: int or (int, int). Returns (N, C, H*sh, W*sw)."""
    if isinstance(scale_factor, (tuple, list)):
        sh, sw = int(scale_factor[0]), int(scale_factor[1])
    else:
        sh = sw = int(scale_factor)
    N, C, H, W = x.shape
    M = N * C * H                       # total input rows
    per_row_out = sh * W * sw           # output elements produced per input row

    k = _pick_row_group(M, per_row_out)
    M2 = M // k
    Kdim = k * W
    Nout = k * per_row_out

    # Constant 0/1 replication matrix.  Output column c of a grouped row comes
    # from input column  src(c) = (c // (sh*W*sw)) * W + (c % (W*sw)) // sw.
    c = jnp.arange(Nout)
    src = (c // (sh * W * sw)) * W + (c % (W * sw)) // sw
    P = (src[None, :] == jnp.arange(Kdim)[:, None]).astype(jnp.float32)

    x2 = x.reshape(M2, Kdim)            # free, contiguous view
    R = _pick_block_rows(M2)

    out2 = pl.pallas_call(
        _upsample_kernel,
        out_shape=jax.ShapeDtypeStruct((M2, Nout), x.dtype),
        grid_spec=pltpu.PrefetchScalarGridSpec(
            num_scalar_prefetch=0,
            grid=(M2 // R,),
            in_specs=[
                pl.BlockSpec((R, Kdim), lambda i: (i, 0)),
                pl.BlockSpec((Kdim, Nout), lambda i: (0, 0)),   # resident constant
            ],
            out_specs=pl.BlockSpec((R, Nout), lambda i: (i, 0)),
        ),
        compiler_params=pltpu.CompilerParams(dimension_semantics=("parallel",)),
    )(x2, P)

    return out2.reshape(N, C, H * sh, W * sw)       # free, contiguous view


# ----------------------------- pure-JAX reference ----------------------------
def upsample_nearest_ref(x, scale_factor):
    if isinstance(scale_factor, (tuple, list)):
        sh, sw = int(scale_factor[0]), int(scale_factor[1])
    else:
        sh = sw = int(scale_factor)
    return jnp.repeat(jnp.repeat(x, sh, axis=2), sw, axis=3)


if __name__ == "__main__":
    N, C, H, W = 2, 4, 16, 16
    scale = 2                                        # Upsample(scale_factor=2, mode='nearest')

    key = jax.random.PRNGKey(0)
    x = jax.random.normal(key, (N, C, H, W), jnp.float32)

    out = jax.block_until_ready(upsample_nearest(x, scale))
    ref = upsample_nearest_ref(x, scale)

    assert out.shape == (N, C, H * scale, W * scale)
    assert jnp.allclose(out, ref, rtol=1e-6, atol=1e-6), float(jnp.max(jnp.abs(out - ref)))
    print("KERNEL_OK")
</pallas_src>

<mosaic_0001>
module attributes {stable_mosaic.version = 11 : i64} {
  func.func @_upsample_kernel(%arg0: i32, %arg1: memref<32x32xf32, #tpu.memory_space<vmem>>, %arg2: memref<32x128xf32, #tpu.memory_space<vmem>>, %arg3: memref<32x128xf32, #tpu.memory_space<vmem>>) attributes {dimension_semantics = [#tpu.dimension_semantics<parallel>], iteration_bounds = array<i64: 2>, scalar_prefetch = 0 : i64, scratch_operands = 0 : i64, tpu.core_type = #tpu.core_type<tc>, window_params = [{transform_indices = @transform_0, window_bounds = array<i64: 32, 32>}, {pipeline_mode = #tpu.pipeline_mode<synchronous>, transform_indices = @transform_1, window_bounds = array<i64: 32, 128>}, {transform_indices = @transform_2, window_bounds = array<i64: 32, 128>}]} {
    %c0 = arith.constant 0 : index
    %c0_0 = arith.constant 0 : index
    %0 = vector.load %arg1[%c0, %c0_0] : memref<32x32xf32, #tpu.memory_space<vmem>>, vector<32x32xf32>
    %c0_1 = arith.constant 0 : index
    %c0_2 = arith.constant 0 : index
    %1 = vector.load %arg2[%c0_1, %c0_2] : memref<32x128xf32, #tpu.memory_space<vmem>>, vector<32x128xf32>
    %cst = arith.constant dense<0.000000e+00> : vector<32x128xf32>
    %2 = tpu.matmul %0, %1, %cst {dimension_numbers = #tpu.dot_dimension_numbers<[1], [0], [0], [1], [0, 0, 1, 1], [], []>, precision = #tpu.contract_precision<fp32>} : vector<32x32xf32>, vector<32x128xf32>, vector<32x128xf32> -> vector<32x128xf32>
    %c0_3 = arith.constant 0 : index
    %c0_4 = arith.constant 0 : index
    %3 = vector.load %arg3[%c0_3, %c0_4] : memref<32x128xf32, #tpu.memory_space<vmem>>, vector<32x128xf32>
    tpu.vector_store %arg3[%c0_3, %c0_4], %2 {strides = array<i32>} : memref<32x128xf32, #tpu.memory_space<vmem>>, vector<32x128xf32>,
    return
  }
  func.func @transform_0(%arg0: i32) -> (i32, i32) {
    %c0_i32 = arith.constant 0 : i32
    %c0_i32_0 = arith.constant 0 : i32
    return %arg0, %c0_i32 : i32, i32
  }
  func.func @transform_1(%arg0: i32) -> (i32, i32) {
    %c0_i32 = arith.constant 0 : i32
    %c0_i32_0 = arith.constant 0 : i32
    %c0_i32_1 = arith.constant 0 : i32
    return %c0_i32, %c0_i32_0 : i32, i32
  }
  func.func @transform_2(%arg0: i32) -> (i32, i32) {
    %c0_i32 = arith.constant 0 : i32
    %c0_i32_0 = arith.constant 0 : i32
    return %arg0, %c0_i32 : i32, i32
  }
}

</mosaic_0001>

<llo_original>
// kernel: tpu_custom_call.1
$region0: #{tpu_custom_call.1}
  #allocation0 [shape = 'u32[]', space=smem, size = 0x4, offset = 0x4, fixed_abs, tag = 'smem constant byte address 0x4 - core index']
  #allocation1 [shape = 'u32[72,128]{1,0:T(1,128)}', space=vmem, size = 0x9000, scoped, tag = 'internal scratch']
  %s0 = inlined_call_operand.vmem [shape: f32[64,32], index: 0, kind: input, shape index: {}]
  %s1 = inlined_call_operand.vmem [shape: f32[32,128], index: 1, kind: input, shape index: {}]
  %s2 = inlined_call_operand.hbm [shape: f32[64,128], index: 2, kind: output, shape index: {}]
  %s3 = sld [smem:[#allocation0]]
  $region41: #{tpu_custom_call.1} parent=0
    _
  %s5 = ssub.s32 1, %s3
  %s6 = scalar_select 0, %s5, %s3
  $region1: #{tpu_custom_call.1} parent=0
    #allocation2 [shape = 'u8[32768]{0}', space=vmem, size = 0x8000, scoped, tag = 'output window, operand 0']
    #allocation3 [shape = 's32[2]{0}', space=sflag, size = 0x8, scoped, tag = 'scoped memory for tpu_custom_call.1']
    %7 = vsyncpa [#allocation3], 0
    %s8 = scalar_lea.sflag [#allocation3], 1
    %9 = vsyncpa %s8, 0
    loop: start=0, step=1, limit=4
    $region2: #{tpu_custom_call.1} parent=1 // loop_pre_header
      _
    $region3: #{tpu_custom_call.1} parent=1 // loop_header
      %s11 = sphi 0, %s15
      %p12 = scmp.ge.s32.totalorder %s11, 4
      %s21 = sphi 0, %s23
      %s24 = sphi 0, %s21
      %s25 = sphi 0, %s24
      %s41 = sphi 0, %s25
      %s45 = sphi 0, %s45
      %s47 = sphi 0, %s45
      %s48 = sphi 0, %s47
      %s62 = sphi 0, %s48
      %s68 = sphi 0, %s70
      %s71 = sphi 0, %s68
      %s72 = sphi 0, %s71
      %s88 = sphi 0, %s72
    $region4: #{tpu_custom_call.1} parent=1 // loop_header_branch
      %14 = sbr.rel (%p12) target = $region8
    $region5: #{tpu_custom_call.1} parent=1 // loop_body
      %s16 = ssub.s32 %s11, 1
      %s17 = ssub.s32 %s11, 2
      %s18 = sadd.s32 %s11, 1
      %s19 = ssub.s32 %s11, %s18
      %p20 = scmp.eq.s32.totalorder %s19, 0
      %s22 = sadd.s32 %s21, 1
      %s23 = scalar_select %p20, %s21, %s22
      %p26 = pneg %p20
      %p27 = scmp.eq.s32.totalorder %s11, 1
      %p28 = por %p26, %p27
      %p29 = scmp.ne.s32.totalorder %s21, %s24
      %p30 = scmp.eq.s32.totalorder %s11, 0
      %p31 = por %p29, %p30
      %p32 = scmp.ne.s32.totalorder %s21, %s24
      %p33 = scmp.eq.s32.totalorder %s16, 1
      %p34 = por %p32, %p33
      %p35 = scmp.ne.s32.totalorder %s24, %s25
      %p36 = scmp.eq.s32.totalorder %s16, 0
      %p37 = por %p35, %p36
      %p38 = scmp.ne.s32.totalorder %s24, %s25
      %p39 = scmp.eq.s32.totalorder %s17, 1
      %p40 = por %p38, %p39
      %p42 = scmp.ne.s32.totalorder %s25, %s41
      %p43 = scmp.eq.s32.totalorder %s17, 0
      %p44 = por %p42, %p43
      %s46 = sadd.s32 %s45, 1
      %p49 = scmp.eq.s32.totalorder %s11, 1
      %p50 = scmp.ne.s32.totalorder %s45, %s47
      %p51 = scmp.eq.s32.totalorder %s11, 0
      %p52 = por %p50, %p51
      %p53 = scmp.ne.s32.totalorder %s45, %s47
      %p54 = scmp.eq.s32.totalorder %s16, 1
      %p55 = por %p53, %p54
      %p56 = scmp.ne.s32.totalorder %s47, %s48
      %p57 = scmp.eq.s32.totalorder %s16, 0
      %p58 = por %p56, %p57
      %p59 = scmp.ne.s32.totalorder %s47, %s48
      %p60 = scmp.eq.s32.totalorder %s17, 1
      %p61 = por %p59, %p60
      %p63 = scmp.ne.s32.totalorder %s48, %s62
      %p64 = scmp.eq.s32.totalorder %s17, 0
      %p65 = por %p63, %p64
      %s66 = ssub.s32 %s11, %s18
      %p67 = scmp.eq.s32.totalorder %s66, 0
      %s69 = sadd.s32 %s68, 1
      %s70 = scalar_select %p67, %s68, %s69
      %p73 = pneg %p67
      %p74 = scmp.eq.s32.totalorder %s11, 1
      %p75 = por %p73, %p74
      %p76 = scmp.ne.s32.totalorder %s68, %s71
      %p77 = scmp.eq.s32.totalorder %s11, 0
      %p78 = por %p76, %p77
      %p79 = scmp.ne.s32.totalorder %s68, %s71
      %p80 = scmp.eq.s32.totalorder %s16, 1
      %p81 = por %p79, %p80
      %p82 = scmp.ne.s32.totalorder %s71, %s72
      %p83 = scmp.eq.s32.totalorder %s16, 0
      %p84 = por %p82, %p83
      %p85 = scmp.ne.s32.totalorder %s71, %s72
      %p86 = scmp.eq.s32.totalorder %s17, 1
      %p87 = por %p85, %p86
      %p89 = scmp.ne.s32.totalorder %s72, %s88
      %p90 = scmp.eq.s32.totalorder %s17, 0
      %p91 = por %p89, %p90
      %p92 = scmp.le.s32.totalorder 1, %s11
      %p93 = scmp.lt.s32.totalorder %s11, 3
      %p94 = pnand %p92, %p93
      %p95 = pneg %p94
      // Predicated region
      $region9: #{tpu_custom_call.1} parent=5 // pred_check
        _
      $region10: #{tpu_custom_call.1} parent=5 // pred_check_branch
        %97 = sbr.rel (%p94) target = $region12
      $region11: #{tpu_custom_call.1} parent=5 // pred_region
        %s98 = ssub.s32 %s11, 1
        // Predicated region
        $region13: #{tpu_custom_call.1} parent=11 // pred_check
          %p99 = pneg %p58
        $region14: #{tpu_custom_call.1} parent=11 // pred_check_branch
          %101 = sbr.rel (%p99) target = $region16
        $region15: #{tpu_custom_call.1} parent=11 // pred_region
          _
        $region16: #{tpu_custom_call.1} parent=11 // pred_fallthru
          _
      $region12: #{tpu_custom_call.1} parent=5 // pred_fallthru
        _
      %p102 = scmp.lt.s32.totalorder %s11, 2
      // Predicated region
      $region17: #{tpu_custom_call.1} parent=5 // pred_check
        %p103 = pneg %p102
      $region18: #{tpu_custom_call.1} parent=5 // pred_check_branch
        %105 = sbr.rel (%p103) target = $region20
      $region19: #{tpu_custom_call.1} parent=5 // pred_region
        // Predicated region
        $region21: #{tpu_custom_call.1} parent=19 // pred_check
          %p106 = pneg %p31
        $region22: #{tpu_custom_call.1} parent=19 // pred_check_branch
          %108 = sbr.rel (%p106) target = $region24
        $region23: #{tpu_custom_call.1} parent=19 // pred_region
          %s109 = smul.u32 4, %s11
          %p110 = scmp.lt.s32.totalorder %s109, 7
          %s111 = scalar_select %p110, %s109, 7
          %s112 = smul.addr %s111, 8
          %s113 = scalar_lea.vmem %s0, %s112
          %s114 = smul.u32 4, %s11
        $region24: #{tpu_custom_call.1} parent=19 // pred_fallthru
          _
      $region20: #{tpu_custom_call.1} parent=5 // pred_fallthru
        _
      %p115 = scmp.le.s32.totalorder 1, %s11
      %p116 = scmp.lt.s32.totalorder %s11, 3
      %p117 = pnand %p115, %p116
      %p118 = pneg %p117
      // Predicated region
      $region25: #{tpu_custom_call.1} parent=5 // pred_check
        _
      $region26: #{tpu_custom_call.1} parent=5 // pred_check_branch
        %120 = sbr.rel (%p117) target = $region28
      $region27: #{tpu_custom_call.1} parent=5 // pred_region
        %s121 = ssub.s32 %s11, 1
        %s122 = smul.u32 4, %s16
        %p123 = scmp.lt.s32.totalorder %s122, 7
        %s124 = scalar_select %p123, %s122, 7
        %s125 = smul.addr %s124, 8
        %s126 = scalar_lea.vmem %s0, %s125
        %p127 = pneg %p37
        %p128 = pneg %p34
        %p129 = pneg %p58
        %p130 = pneg %p55
        %p131 = pneg %p84
        %p132 = pneg %p81
        %s133 = sand.u32 %s71, 1
        %s134 = scalar_lea.sflag [#allocation3], %s133
        %s135 = sand.u32 %s71, 1
        %s136 = smul.addr %s135, 32
        %s137 = scalar_lea.vmem [#allocation2], %s136
        %s138 = smul.u32 4, %s16
        %p139 = scmp.lt.s32.totalorder %s138, 7
        %s140 = scalar_select %p139, %s138, 7
        %s141 = smul.addr %s140, 8
        %s142 = scalar_lea.vmem %s0, %s141
        %s143 = smul.u32 4, %s16
        %s144 = smul.u32 4, %s16
        %v145 = vld [vmem:[%s142] sm:$0xff]
        %v146 = vld [vmem:[%s142 + $0x8] sm:$0xff]
        %v147 = vld [vmem:[%s142 + $0x10] sm:$0xff]
        %v148 = vld [vmem:[%s142 + $0x18] sm:$0xff]
        %v149 = vld [vmem:[%s1] sm:$0xff]
        %v150 = vld [vmem:[%s1 + $0x8] sm:$0xff]
        %v151 = vld [vmem:[%s1 + $0x10] sm:$0xff]
        %v152 = vld [vmem:[%s1 + $0x18] sm:$0xff]
        %vm153 = vcmask 261120
        %v155 = vsel %vm153, %v145, 0
        %v158 = vsel %vm153, %v146, 0
        %v161 = vsel %vm153, %v147, 0
        %v164 = vsel %vm153, %v148, 0
        %166 = vmatpush.msra.mxu0 0.0
        %167 = vmatpush.msra.mxu0 0.0
        %168 = vmatpush.msra.mxu0 0.0
        %169 = vmatpush.msra.mxu0 0.0
        %170 = vmatpush.msra.mxu0 0.0
        %171 = vmatpush.msra.mxu0 0.0
        %172 = vmatpush.msra.mxu0 0.0
        %173 = vmatpush.msra.mxu0 0.0
        %174 = vmatpush.msra.mxu0 0.0
        %175 = vmatpush.msra.mxu0 0.0
        %176 = vmatpush.msra.mxu0 0.0
        %177 = vmatpush.msra.mxu0 0.0
        %v178 = vand.u32 %v152, 4294901760
        %179 = vmatpush.msra.mxu0 %v178
        %v180 = vand.u32 %v151, 4294901760
        %181 = vmatpush.msra.mxu0 %v180
        %v182 = vand.u32 %v150, 4294901760
        %183 = vmatpush.msra.mxu0 %v182
        %v184 = vand.u32 %v149, 4294901760
        %185 = vmatpush.msra.mxu0 %v184
        %v186 = vand.u32 %v155, 4294901760
        %v187 = vsub.f32 %v155, %v186
        %v188 = vand.u32 %v187, 4294901760
        %v189 = vsub.f32 %v187, %v188
        %v190 = vand.u32 %v189, 4294901760
        %191 = vmatmul.f32.gmra.mxu0 %v190
        %v192 = vpop.f32.mrf.mxu0
        %v193 = vadd.f32 0.0, %v192
        %v194 = vand.u32 %v158, 4294901760
        %v195 = vsub.f32 %v158, %v194
        %v196 = vand.u32 %v195, 4294901760
        %v197 = vsub.f32 %v195, %v196
        %v198 = vand.u32 %v197, 4294901760
        %199 = vmatmul.f32.gmra.mxu0 %v198
        %v200 = vpop.f32.mrf.mxu0
        %v201 = vadd.f32 0.0, %v200
        %v202 = vand.u32 %v161, 4294901760
        %v203 = vsub.f32 %v161, %v202
        %v204 = vand.u32 %v203, 4294901760
        %v205 = vsub.f32 %v203, %v204
        %v206 = vand.u32 %v205, 4294901760
        %207 = vmatmul.f32.gmra.mxu0 %v206
        %v208 = vpop.f32.mrf.mxu0
        %v209 = vadd.f32 0.0, %v208
        %v210 = vand.u32 %v164, 4294901760
        %v211 = vsub.f32 %v164, %v210
        %v212 = vand.u32 %v211, 4294901760
        %v213 = vsub.f32 %v211, %v212
        %v214 = vand.u32 %v213, 4294901760
        %215 = vmatmul.f32.gmra.mxu0 %v214
        %v216 = vpop.f32.mrf.mxu0
        %v217 = vadd.f32 0.0, %v216
        %218 = vdwg.mxu0
        %219 = vmatpush.msra.mxu0 0.0
        %220 = vmatpush.msra.mxu0 0.0
        %221 = vmatpush.msra.mxu0 0.0
        %222 = vmatpush.msra.mxu0 0.0
        %223 = vmatpush.msra.mxu0 0.0
        %224 = vmatpush.msra.mxu0 0.0
        %225 = vmatpush.msra.mxu0 0.0
        %226 = vmatpush.msra.mxu0 0.0
        %227 = vmatpush.msra.mxu0 0.0
        %228 = vmatpush.msra.mxu0 0.0
        %229 = vmatpush.msra.mxu0 0.0
        %230 = vmatpush.msra.mxu0 0.0
        %v231 = vand.u32 %v152, 4294901760
        %v232 = vsub.f32 %v152, %v231
        %v233 = vand.u32 %v232, 4294901760
        %v234 = vsub.f32 %v232, %v233
        %v235 = vand.u32 %v234, 4294901760
        %236 = vmatpush.msra.mxu0 %v235
        %v237 = vand.u32 %v151, 4294901760
        %v238 = vsub.f32 %v151, %v237
        %v239 = vand.u32 %v238, 4294901760
        %v240 = vsub.f32 %v238, %v239
        %v241 = vand.u32 %v240, 4294901760
        %242 = vmatpush.msra.mxu0 %v241
        %v243 = vand.u32 %v150, 4294901760
        %v244 = vsub.f32 %v150, %v243
        %v245 = vand.u32 %v244, 4294901760
        %v246 = vsub.f32 %v244, %v245
        %v247 = vand.u32 %v246, 4294901760
        %248 = vmatpush.msra.mxu0 %v247
        %v249 = vand.u32 %v149, 4294901760
        %v250 = vsub.f32 %v149, %v249
        %v251 = vand.u32 %v250, 4294901760
        %v252 = vsub.f32 %v250, %v251
        %v253 = vand.u32 %v252, 4294901760
        %254 = vmatpush.msra.mxu0 %v253
        %v255 = vand.u32 %v155, 4294901760
        %256 = vmatmul.f32.gmra.mxu0 %v255
        %v257 = vpop.f32.mrf.mxu0
        %v258 = vadd.f32 %v193, %v257
        %v259 = vand.u32 %v158, 4294901760
        %260 = vmatmul.f32.gmra.mxu0 %v259
        %v261 = vpop.f32.mrf.mxu0
        %v262 = vadd.f32 %v201, %v261
        %v263 = vand.u32 %v161, 4294901760
        %264 = vmatmul.f32.gmra.mxu0 %v263
        %v265 = vpop.f32.mrf.mxu0
        %v266 = vadd.f32 %v209, %v265
        %v267 = vand.u32 %v164, 4294901760
        %268 = vmatmul.f32.gmra.mxu0 %v267
        %v269 = vpop.f32.mrf.mxu0
        %v270 = vadd.f32 %v217, %v269
        %271 = vdwg.mxu0
        %272 = vmatpush.msra.mxu0 0.0
        %273 = vmatpush.msra.mxu0 0.0
        %274 = vmatpush.msra.mxu0 0.0
        %275 = vmatpush.msra.mxu0 0.0
        %276 = vmatpush.msra.mxu0 0.0
        %277 = vmatpush.msra.mxu0 0.0
        %278 = vmatpush.msra.mxu0 0.0
        %279 = vmatpush.msra.mxu0 0.0
        %280 = vmatpush.msra.mxu0 0.0
        %281 = vmatpush.msra.mxu0 0.0
        %282 = vmatpush.msra.mxu0 0.0
        %283 = vmatpush.msra.mxu0 0.0
        %v284 = vand.u32 %v152, 4294901760
        %v285 = vsub.f32 %v152, %v284
        %286 = vmatpush.msra.mxu0 %v285
        %v287 = vand.u32 %v151, 4294901760
        %v288 = vsub.f32 %v151, %v287
        %289 = vmatpush.msra.mxu0 %v288
        %v290 = vand.u32 %v150, 4294901760
        %v291 = vsub.f32 %v150, %v290
        %292 = vmatpush.msra.mxu0 %v291
        %v293 = vand.u32 %v149, 4294901760
        %v294 = vsub.f32 %v149, %v293
        %295 = vmatpush.msra.mxu0 %v294
        %v296 = vand.u32 %v155, 4294901760
        %v297 = vsub.f32 %v155, %v296
        %298 = vmatmul.f32.gmra.mxu0 %v297
        %v299 = vpop.f32.mrf.mxu0
        %v300 = vadd.f32 %v258, %v299
        %v301 = vand.u32 %v158, 4294901760
        %v302 = vsub.f32 %v158, %v301
        %303 = vmatmul.f32.gmra.mxu0 %v302
        %v304 = vpop.f32.mrf.mxu0
        %v305 = vadd.f32 %v262, %v304
        %v306 = vand.u32 %v161, 4294901760
        %v307 = vsub.f32 %v161, %v306
        %308 = vmatmul.f32.gmra.mxu0 %v307
        %v309 = vpop.f32.mrf.mxu0
        %v310 = vadd.f32 %v266, %v309
        %v311 = vand.u32 %v164, 4294901760
        %v312 = vsub.f32 %v164, %v311
        %313 = vmatmul.f32.gmra.mxu0 %v312
        %v314 = vpop.f32.mrf.mxu0
        %v315 = vadd.f32 %v270, %v314
        %316 = vdwg.mxu0
        %317 = vmatpush.msra.mxu0 0.0
        %318 = vmatpush.msra.mxu0 0.0
        %319 = vmatpush.msra.mxu0 0.0
        %320 = vmatpush.msra.mxu0 0.0
        %321 = vmatpush.msra.mxu0 0.0
        %322 = vmatpush.msra.mxu0 0.0
        %323 = vmatpush.msra.mxu0 0.0
        %324 = vmatpush.msra.mxu0 0.0
        %325 = vmatpush.msra.mxu0 0.0
        %326 = vmatpush.msra.mxu0 0.0
        %327 = vmatpush.msra.mxu0 0.0
        %328 = vmatpush.msra.mxu0 0.0
        %v329 = vand.u32 %v152, 4294901760
        %330 = vmatpush.msra.mxu0 %v329
        %v331 = vand.u32 %v151, 4294901760
        %332 = vmatpush.msra.mxu0 %v331
        %v333 = vand.u32 %v150, 4294901760
        %334 = vmatpush.msra.mxu0 %v333
        %v335 = vand.u32 %v149, 4294901760
        %336 = vmatpush.msra.mxu0 %v335
        %v337 = vand.u32 %v155, 4294901760
        %v338 = vsub.f32 %v155, %v337
        %v339 = vand.u32 %v338, 4294901760
        %340 = vmatmul.f32.gmra.mxu0 %v339
        %v341 = vpop.f32.mrf.mxu0
        %v342 = vadd.f32 %v300, %v341
        %v343 = vand.u32 %v158, 4294901760
        %v344 = vsub.f32 %v158, %v343
        %v345 = vand.u32 %v344, 4294901760
        %346 = vmatmul.f32.gmra.mxu0 %v345
        %v347 = vpop.f32.mrf.mxu0
        %v348 = vadd.f32 %v305, %v347
        %v349 = vand.u32 %v161, 4294901760
        %v350 = vsub.f32 %v161, %v349
        %v351 = vand.u32 %v350, 4294901760
        %352 = vmatmul.f32.gmra.mxu0 %v351
        %v353 = vpop.f32.mrf.mxu0
        %v354 = vadd.f32 %v310, %v353
        %v355 = vand.u32 %v164, 4294901760
        %v356 = vsub.f32 %v164, %v355
        %v357 = vand.u32 %v356, 4294901760
        %358 = vmatmul.f32.gmra.mxu0 %v357
        %v359 = vpop.f32.mrf.mxu0
        %v360 = vadd.f32 %v315, %v359
        %361 = vdwg.mxu0
        %362 = vmatpush.msra.mxu0 0.0
        %363 = vmatpush.msra.mxu0 0.0
        %364 = vmatpush.msra.mxu0 0.0
        %365 = vmatpush.msra.mxu0 0.0
        %366 = vmatpush.msra.mxu0 0.0
        %367 = vmatpush.msra.mxu0 0.0
        %368 = vmatpush.msra.mxu0 0.0
        %369 = vmatpush.msra.mxu0 0.0
        %370 = vmatpush.msra.mxu0 0.0
        %371 = vmatpush.msra.mxu0 0.0
        %372 = vmatpush.msra.mxu0 0.0
        %373 = vmatpush.msra.mxu0 0.0
        %v374 = vand.u32 %v152, 4294901760
        %v375 = vsub.f32 %v152, %v374
        %v376 = vand.u32 %v375, 4294901760
        %377 = vmatpush.msra.mxu0 %v376
        %v378 = vand.u32 %v151, 4294901760
        %v379 = vsub.f32 %v151, %v378
        %v380 = vand.u32 %v379, 4294901760
        %381 = vmatpush.msra.mxu0 %v380
        %v382 = vand.u32 %v150, 4294901760
        %v383 = vsub.f32 %v150, %v382
        %v384 = vand.u32 %v383, 4294901760
        %385 = vmatpush.msra.mxu0 %v384
        %v386 = vand.u32 %v149, 4294901760
        %v387 = vsub.f32 %v149, %v386
        %v388 = vand.u32 %v387, 4294901760
        %389 = vmatpush.msra.mxu0 %v388
        %v390 = vand.u32 %v155, 4294901760
        %391 = vmatmul.f32.gmra.mxu0 %v390
        %v392 = vpop.f32.mrf.mxu0
        %v393 = vadd.f32 %v342, %v392
        %v394 = vand.u32 %v158, 4294901760
        %395 = vmatmul.f32.gmra.mxu0 %v394
        %v396 = vpop.f32.mrf.mxu0
        %v397 = vadd.f32 %v348, %v396
        %v398 = vand.u32 %v161, 4294901760
        %399 = vmatmul.f32.gmra.mxu0 %v398
        %v400 = vpop.f32.mrf.mxu0
        %v401 = vadd.f32 %v354, %v400
        %v402 = vand.u32 %v164, 4294901760
        %403 = vmatmul.f32.gmra.mxu0 %v402
        %v404 = vpop.f32.mrf.mxu0
        %v405 = vadd.f32 %v360, %v404
        %406 = vdwg.mxu0
        %407 = vmatpush.msra.mxu0 0.0
        %408 = vmatpush.msra.mxu0 0.0
        %409 = vmatpush.msra.mxu0 0.0
        %410 = vmatpush.msra.mxu0 0.0
        %411 = vmatpush.msra.mxu0 0.0
        %412 = vmatpush.msra.mxu0 0.0
        %413 = vmatpush.msra.mxu0 0.0
        %414 = vmatpush.msra.mxu0 0.0
        %415 = vmatpush.msra.mxu0 0.0
        %416 = vmatpush.msra.mxu0 0.0
        %417 = vmatpush.msra.mxu0 0.0
        %418 = vmatpush.msra.mxu0 0.0
        %v419 = vand.u32 %v152, 4294901760
        %420 = vmatpush.msra.mxu0 %v419
        %v421 = vand.u32 %v151, 4294901760
        %422 = vmatpush.msra.mxu0 %v421
        %v423 = vand.u32 %v150, 4294901760
        %424 = vmatpush.msra.mxu0 %v423
        %v425 = vand.u32 %v149, 4294901760
        %426 = vmatpush.msra.mxu0 %v425
        %v427 = vand.u32 %v155, 4294901760
        %428 = vmatmul.f32.gmra.mxu0 %v427
        %v429 = vpop.f32.mrf.mxu0
        %v430 = vadd.f32 %v393, %v429
        %v431 = vand.u32 %v158, 4294901760
        %432 = vmatmul.f32.gmra.mxu0 %v431
        %v433 = vpop.f32.mrf.mxu0
        %v434 = vadd.f32 %v397, %v433
        %v435 = vand.u32 %v161, 4294901760
        %436 = vmatmul.f32.gmra.mxu0 %v435
        %v437 = vpop.f32.mrf.mxu0
        %v438 = vadd.f32 %v401, %v437
        %v439 = vand.u32 %v164, 4294901760
        %440 = vmatmul.f32.gmra.mxu0 %v439
        %v441 = vpop.f32.mrf.mxu0
        %v442 = vadd.f32 %v405, %v441
        %443 = vdwg.mxu0
        %444 = vst [vmem:[%s137] sm:$0xff] %v430
        %445 = vst [vmem:[%s137 + $0x8] sm:$0xff] %v434
        %446 = vst [vmem:[%s137 + $0x10] sm:$0xff] %v438
        %447 = vst [vmem:[%s137 + $0x18] sm:$0xff] %v442
        %s448 = sand.u32 %s71, 1
        %s449 = scalar_lea.sflag [#allocation3], %s448
        %s450 = sand.u32 %s71, 1
        %s451 = smul.addr %s450, 32
        %s452 = scalar_lea.vmem [#allocation2], %s451
        // Predicated region
        $region29: #{tpu_custom_call.1} parent=27 // pred_check
          %p453 = pneg %p81
        $region30: #{tpu_custom_call.1} parent=27 // pred_check_branch
          %455 = sbr.rel (%p453) target = $region32
        $region31: #{tpu_custom_call.1} parent=27 // pred_region
          %s456 = smul.u32 4, %s16
          %458 = vsyncadd %s449, 0
          %s459 = smul.addr %s456, 8
          %s460 = scalar_lea.hbm %s2, %s459
          %s461 = sshll.u32 %s452, 4
          %s462 = int_to_ptr.vmem [resolvable:$true] %s461
          %s463 = sshll.u32 %s460, 4
          %s464 = int_to_ptr.hbm [resolvable:$true] %s463
          %469 = dma.vmem_to_hbm [thread:$0]  %s462, 512, %s464, %s449, 128, 128, 8
        $region32: #{tpu_custom_call.1} parent=27 // pred_fallthru
          _
      $region28: #{tpu_custom_call.1} parent=5 // pred_fallthru
        _
      %p470 = scmp.le.s32.totalorder 2, %s11
      // Predicated region
      $region33: #{tpu_custom_call.1} parent=5 // pred_check
        %p471 = pneg %p470
      $region34: #{tpu_custom_call.1} parent=5 // pred_check_branch
        %473 = sbr.rel (%p471) target = $region36
      $region35: #{tpu_custom_call.1} parent=5 // pred_region
        %s474 = ssub.s32 %s11, 2
        // Predicated region
        $region37: #{tpu_custom_call.1} parent=35 // pred_check
          %p475 = pneg %p87
        $region38: #{tpu_custom_call.1} parent=35 // pred_check_branch
          %477 = sbr.rel (%p475) target = $region40
        $region39: #{tpu_custom_call.1} parent=35 // pred_region
          %s478 = sand.u32 %s72, 1
          %s479 = scalar_lea.sflag [#allocation3], %s478
          %s480 = sand.u32 %s72, 1
          %s481 = smul.addr %s480, 32
          %s482 = scalar_lea.vmem [#allocation2], %s481
          %484 = dma.done %s479, 512
        $region40: #{tpu_custom_call.1} parent=35 // pred_fallthru
          _
      $region36: #{tpu_custom_call.1} parent=5 // pred_fallthru
        _
    $region6: #{tpu_custom_call.1} parent=1 // loop_footer
      %s15 = sadd.s32 1, %s11
    $region7: #{tpu_custom_call.1} parent=1 // loop_footer_branch
      %10 = sbr.rel target = $region3
    $region8: #{tpu_custom_call.1} parent=1 // loop_exit
      _
    %485 = vsyncpa [#allocation3], 1
    %s486 = scalar_lea.sflag [#allocation3], 1
    %487 = vsyncpa %s486, 1

</llo_original>
